<compile_context>
chip_gen: v7x
topology: tpu7x:2x2x1
jax: 0.10.0
libtpu: 0.0.40
codegen_flags: <defaults>
</compile_context>

<pallas_src>
import jax
import jax.numpy as jnp
from jax import lax
from jax.experimental import pallas as pl
from jax.experimental.pallas import tpu as pltpu


def _round_up(n, m):
    return ((n + m - 1) // m) * m


def mlp_kernel(x_ref, w1_ref, b1_ref, w2_ref, b2_ref, w3_ref, b3_ref, o_ref):
    cdt = x_ref.dtype  # compute dtype for MXU operands (bf16 by default)

    # Hidden layer 1: Linear + ReLU (f32 accumulation, f32 bias/activation)
    h = jnp.dot(x_ref[...], w1_ref[...], preferred_element_type=jnp.float32)
    h = jnp.maximum(h + b1_ref[...], 0.0).astype(cdt)

    # Hidden layer 2: Linear + ReLU
    h = jnp.dot(h, w2_ref[...], preferred_element_type=jnp.float32)
    h = jnp.maximum(h + b2_ref[...], 0.0).astype(cdt)

    # Output layer (H2 -> 1): compute as (8, H2p) @ (tile_b, H2p)^T -> (8, tile_b).
    # Only row 0 of w3_ref holds real weights (rows 1..7 are zero padding), so
    # row 0 of the result is the lane-dense output row for this batch tile.
    out = lax.dot_general(
        w3_ref[...], h,
        dimension_numbers=(((1,), (1,)), ((), ())),
        preferred_element_type=jnp.float32,
    )
    o_ref[...] = (out[0:1, :] + b3_ref[...]).astype(o_ref.dtype)


def mlp_forward(x, params, *, tile_b=None, compute_dtype=jnp.bfloat16):
    """Fused MLP forward.  x: (B, D_in) f32.  params hold weights transposed
    to (in_features, out_features) and biases as (1, out_features)."""
    B, D_in = x.shape
    w1, b1 = params["w1"], params["b1"]
    w2, b2 = params["w2"], params["b2"]
    w3, b3 = params["w3"], params["b3"]
    H1, H2 = w1.shape[1], w2.shape[1]

    # --- pad hidden dims to lane-dense multiples of 128 (exact, see header) ---
    H1p = _round_up(H1, 128)
    H2p = _round_up(H2, 128)
    w1p = jnp.pad(w1, ((0, 0), (0, H1p - H1))).astype(compute_dtype)     # (D_in, H1p)
    b1p = jnp.pad(b1, ((0, 0), (0, H1p - H1)))                           # (1, H1p) f32
    w2p = jnp.pad(w2, ((0, H1p - H1), (0, H2p - H2))).astype(compute_dtype)  # (H1p, H2p)
    b2p = jnp.pad(b2, ((0, 0), (0, H2p - H2)))                           # (1, H2p) f32
    # w3 as an (8, H2p) row block: row 0 = real weights, rows 1..7 = zeros.
    w3p = jnp.pad(w3.T, ((0, 7), (0, H2p - H2))).astype(compute_dtype)   # (8, H2p)
    b3p = b3.astype(jnp.float32)                                         # (1, 1)

    # --- batch tiling: bounded tile, >=2 parallel steps once batch is large ---
    if tile_b is None:
        if B <= 256:
            tile_b = _round_up(max(B, 8), 16)          # single small tile
        else:
            tile_b = min(1024, _round_up((B + 1) // 2, 128))
    else:
        tile_b = _round_up(max(tile_b, 8), 16)

    Bp = _round_up(B, tile_b)
    num_tiles = Bp // tile_b
    xp = x if Bp == B else jnp.pad(x, ((0, Bp - B), (0, 0)))
    xp = xp.astype(compute_dtype)

    full2d = lambda a: pl.BlockSpec(a.shape, lambda i: (0, 0))  # resident block

    out2d = pl.pallas_call(
        mlp_kernel,
        out_shape=jax.ShapeDtypeStruct((num_tiles, tile_b), jnp.float32),
        grid_spec=pltpu.PrefetchScalarGridSpec(
            num_scalar_prefetch=0,
            grid=(num_tiles,),
            in_specs=[
                pl.BlockSpec((tile_b, D_in), lambda i: (i, 0)),  # x batch tile
                full2d(w1p), full2d(b1p),
                full2d(w2p), full2d(b2p),
                full2d(w3p), full2d(b3p),
            ],
            out_specs=pl.BlockSpec((1, tile_b), lambda i: (i, 0)),  # lane-dense row
        ),
        compiler_params=pltpu.CompilerParams(
            dimension_semantics=("parallel",),
        ),
    )(xp, w1p, b1p, w2p, b2p, w3p, b3p)

    out = out2d.reshape(Bp, 1)[:B]
    return out.astype(x.dtype)


def init_params(key, units_per_layer):
    """Deterministic init mirroring nn.Linear's U(-1/sqrt(fan_in), 1/sqrt(fan_in)).
    Weights stored transposed: (in_features, out_features); biases (1, out)."""
    dims = []
    for i in range(len(units_per_layer) - 2):
        dims.append((units_per_layer[i], units_per_layer[i + 1]))
    dims.append((units_per_layer[-2], 1))

    params = {}
    for idx, (fan_in, fan_out) in enumerate(dims, start=1):
        key, kw, kb = jax.random.split(key, 3)
        bound = 1.0 / jnp.sqrt(jnp.float32(fan_in))
        params[f"w{idx}"] = jax.random.uniform(
            kw, (fan_in, fan_out), jnp.float32, -bound, bound)
        params[f"b{idx}"] = jax.random.uniform(
            kb, (1, fan_out), jnp.float32, -bound, bound)
    return params


def mlp_reference(x, params, compute_dtype=jnp.float32):
    """Plain-JAX reference; compute_dtype matches the kernel's matmul precision."""
    cd = compute_dtype
    w1, w2, w3 = (params[k].astype(cd) for k in ("w1", "w2", "w3"))
    h = jnp.dot(x.astype(cd), w1, preferred_element_type=jnp.float32) + params["b1"]
    h = jnp.maximum(h, 0.0)
    h = jnp.dot(h.astype(cd), w2, preferred_element_type=jnp.float32) + params["b2"]
    h = jnp.maximum(h, 0.0)
    return jnp.dot(h.astype(cd), w3, preferred_element_type=jnp.float32) + params["b3"]


if __name__ == "__main__":
    # TorchModel(units_per_layer=[32, 64, 48, 1]):
    #   Linear(32,64)+ReLU, Linear(64,48)+ReLU, Linear(48,1)
    units_per_layer = [32, 64, 48, 1]
    batch = 8

    key = jax.random.PRNGKey(0)
    key, kx = jax.random.split(key)
    x = jax.random.normal(kx, (batch, units_per_layer[0]), jnp.float32)
    params = init_params(jax.random.PRNGKey(0), units_per_layer)

    out = jax.block_until_ready(mlp_forward(x, params))
    assert out.shape == (batch, 1), out.shape

    # Tight check vs a reference with the same bf16-operand / f32-accum recipe.
    ref_matched = mlp_reference(x, params, compute_dtype=jnp.bfloat16)
    assert jnp.allclose(out, ref_matched, atol=1e-3, rtol=1e-3), (out, ref_matched)

    # Looser check vs the full-f32 PyTorch-equivalent forward.
    ref_f32 = mlp_reference(x, params, compute_dtype=jnp.float32)
    assert jnp.allclose(out, ref_f32, atol=5e-2, rtol=5e-2), (out, ref_f32)

    print("KERNEL_OK")
</pallas_src>

<mosaic_0001>
module attributes {stable_mosaic.version = 11 : i64} {
  func.func @mlp_kernel(%arg0: i32, %arg1: memref<16x32xbf16, #tpu.memory_space<vmem>>, %arg2: memref<32x128xbf16, #tpu.memory_space<vmem>>, %arg3: memref<1x128xf32, #tpu.memory_space<vmem>>, %arg4: memref<128x128xbf16, #tpu.memory_space<vmem>>, %arg5: memref<1x128xf32, #tpu.memory_space<vmem>>, %arg6: memref<8x128xbf16, #tpu.memory_space<vmem>>, %arg7: memref<1x1xf32, #tpu.memory_space<vmem>>, %arg8: memref<1x16xf32, #tpu.memory_space<vmem>>) attributes {dimension_semantics = [#tpu.dimension_semantics<parallel>], iteration_bounds = array<i64: 1>, scalar_prefetch = 0 : i64, scratch_operands = 0 : i64, tpu.core_type = #tpu.core_type<tc>, window_params = [{transform_indices = @transform_0, window_bounds = array<i64: 16, 32>}, {pipeline_mode = #tpu.pipeline_mode<synchronous>, transform_indices = @transform_1, window_bounds = array<i64: 32, 128>}, {pipeline_mode = #tpu.pipeline_mode<synchronous>, transform_indices = @transform_2, window_bounds = array<i64: 1, 128>}, {pipeline_mode = #tpu.pipeline_mode<synchronous>, transform_indices = @transform_3, window_bounds = array<i64: 128, 128>}, {pipeline_mode = #tpu.pipeline_mode<synchronous>, transform_indices = @transform_4, window_bounds = array<i64: 1, 128>}, {pipeline_mode = #tpu.pipeline_mode<synchronous>, transform_indices = @transform_5, window_bounds = array<i64: 8, 128>}, {pipeline_mode = #tpu.pipeline_mode<synchronous>, transform_indices = @transform_6, window_bounds = array<i64: 1, 1>}, {transform_indices = @transform_7, window_bounds = array<i64: 1, 16>}]} {
    %c0 = arith.constant 0 : index
    %c0_0 = arith.constant 0 : index
    %0 = vector.load %arg1[%c0, %c0_0] : memref<16x32xbf16, #tpu.memory_space<vmem>>, vector<16x32xbf16>
    %c0_1 = arith.constant 0 : index
    %c0_2 = arith.constant 0 : index
    %1 = vector.load %arg2[%c0_1, %c0_2] : memref<32x128xbf16, #tpu.memory_space<vmem>>, vector<32x128xbf16>
    %cst = arith.constant dense<0.000000e+00> : vector<16x128xf32>
    %2 = tpu.matmul %0, %1, %cst {dimension_numbers = #tpu.dot_dimension_numbers<[1], [0], [0], [1], [0, 0, 1, 1], [], []>} : vector<16x32xbf16>, vector<32x128xbf16>, vector<16x128xf32> -> vector<16x128xf32>
    %c0_3 = arith.constant 0 : index
    %c0_4 = arith.constant 0 : index
    %3 = vector.load %arg3[%c0_3, %c0_4] : memref<1x128xf32, #tpu.memory_space<vmem>>, vector<1x128xf32>
    %4 = vector.broadcast %3 : vector<1x128xf32> to vector<16x128xf32>
    %5 = arith.addf %2, %4 : vector<16x128xf32>
    %cst_5 = arith.constant 0.000000e+00 : f32
    %6 = vector.broadcast %cst_5 : f32 to vector<16x128xf32>
    %7 = arith.maximumf %5, %6 : vector<16x128xf32>
    %8 = arith.truncf %7 : vector<16x128xf32> to vector<16x128xbf16>
    %c0_6 = arith.constant 0 : index
    %c0_7 = arith.constant 0 : index
    %9 = vector.load %arg4[%c0_6, %c0_7] : memref<128x128xbf16, #tpu.memory_space<vmem>>, vector<128x128xbf16>
    %cst_8 = arith.constant dense<0.000000e+00> : vector<16x128xf32>
    %10 = tpu.matmul %8, %9, %cst_8 {dimension_numbers = #tpu.dot_dimension_numbers<[1], [0], [0], [1], [0, 0, 1, 1], [], []>} : vector<16x128xbf16>, vector<128x128xbf16>, vector<16x128xf32> -> vector<16x128xf32>
    %c0_9 = arith.constant 0 : index
    %c0_10 = arith.constant 0 : index
    %11 = vector.load %arg5[%c0_9, %c0_10] : memref<1x128xf32, #tpu.memory_space<vmem>>, vector<1x128xf32>
    %12 = vector.broadcast %11 : vector<1x128xf32> to vector<16x128xf32>
    %13 = arith.addf %10, %12 : vector<16x128xf32>
    %cst_11 = arith.constant 0.000000e+00 : f32
    %14 = vector.broadcast %cst_11 : f32 to vector<16x128xf32>
    %15 = arith.maximumf %13, %14 : vector<16x128xf32>
    %16 = arith.truncf %15 : vector<16x128xf32> to vector<16x128xbf16>
    %c0_12 = arith.constant 0 : index
    %c0_13 = arith.constant 0 : index
    %17 = vector.load %arg6[%c0_12, %c0_13] : memref<8x128xbf16, #tpu.memory_space<vmem>>, vector<8x128xbf16>
    %cst_14 = arith.constant dense<0.000000e+00> : vector<8x16xf32>
    %18 = tpu.matmul %17, %16, %cst_14 {dimension_numbers = #tpu.dot_dimension_numbers<[1], [1], [0], [0], [0, 0, 1, 0], [], []>} : vector<8x128xbf16>, vector<16x128xbf16>, vector<8x16xf32> -> vector<8x16xf32>
    %19 = vector.extract_strided_slice %18 {offsets = [0, 0], sizes = [1, 16], strides = [1, 1]} : vector<8x16xf32> to vector<1x16xf32>
    %c0_15 = arith.constant 0 : index
    %c0_16 = arith.constant 0 : index
    %20 = vector.load %arg7[%c0_15, %c0_16] : memref<1x1xf32, #tpu.memory_space<vmem>>, vector<1x1xf32>
    %21 = vector.broadcast %20 : vector<1x1xf32> to vector<1x16xf32>
    %22 = arith.addf %19, %21 : vector<1x16xf32>
    %c0_17 = arith.constant 0 : index
    %c0_18 = arith.constant 0 : index
    %23 = vector.load %arg8[%c0_17, %c0_18] : memref<1x16xf32, #tpu.memory_space<vmem>>, vector<1x16xf32>
    tpu.vector_store %arg8[%c0_17, %c0_18], %22 {strides = array<i32>} : memref<1x16xf32, #tpu.memory_space<vmem>>, vector<1x16xf32>,
    return
  }
  func.func @transform_0(%arg0: i32) -> (i32, i32) {
    %c0_i32 = arith.constant 0 : i32
    %c0_i32_0 = arith.constant 0 : i32
    return %arg0, %c0_i32 : i32, i32
  }
  func.func @transform_1(%arg0: i32) -> (i32, i32) {
    %c0_i32 = arith.constant 0 : i32
    %c0_i32_0 = arith.constant 0 : i32
    %c0_i32_1 = arith.constant 0 : i32
    return %c0_i32, %c0_i32_0 : i32, i32
  }
  func.func @transform_2(%arg0: i32) -> (i32, i32) {
    %c0_i32 = arith.constant 0 : i32
    %c0_i32_0 = arith.constant 0 : i32
    %c0_i32_1 = arith.constant 0 : i32
    return %c0_i32, %c0_i32_0 : i32, i32
  }
  func.func @transform_3(%arg0: i32) -> (i32, i32) {
    %c0_i32 = arith.constant 0 : i32
    %c0_i32_0 = arith.constant 0 : i32
    %c0_i32_1 = arith.constant 0 : i32
    return %c0_i32, %c0_i32_0 : i32, i32
  }
  func.func @transform_4(%arg0: i32) -> (i32, i32) {
    %c0_i32 = arith.constant 0 : i32
    %c0_i32_0 = arith.constant 0 : i32
    %c0_i32_1 = arith.constant 0 : i32
    return %c0_i32, %c0_i32_0 : i32, i32
  }
  func.func @transform_5(%arg0: i32) -> (i32, i32) {
    %c0_i32 = arith.constant 0 : i32
    %c0_i32_0 = arith.constant 0 : i32
    %c0_i32_1 = arith.constant 0 : i32
    return %c0_i32, %c0_i32_0 : i32, i32
  }
  func.func @transform_6(%arg0: i32) -> (i32, i32) {
    %c0_i32 = arith.constant 0 : i32
    %c0_i32_0 = arith.constant 0 : i32
    %c0_i32_1 = arith.constant 0 : i32
    return %c0_i32, %c0_i32_0 : i32, i32
  }
  func.func @transform_7(%arg0: i32) -> (i32, i32) {
    %c0_i32 = arith.constant 0 : i32
    %c0_i32_0 = arith.constant 0 : i32
    return %arg0, %c0_i32 : i32, i32
  }
}

</mosaic_0001>

<llo_original>
// kernel: tpu_custom_call.1
$region0: #{tpu_custom_call.1}
  #allocation0 [shape = 'u32[]', space=smem, size = 0x4, offset = 0x4, fixed_abs, tag = 'smem constant byte address 0x4 - core index']
  #allocation1 [shape = 'u32[144,128]{1,0:T(1,128)}', space=vmem, size = 0x12000, scoped, tag = 'internal scratch']
  #allocation2 [shape = 'f32[1,1]{1,0:T(1,128)S(1)}', space=vmem, size = 0x200, scoped, tag = 'scoped memory for tpu_custom_call.1']
  %s0 = inlined_call_operand.hbm [shape: bf16[16,32], index: 0, kind: input, shape index: {}]
  %s1 = inlined_call_operand.hbm [shape: bf16[32,128], index: 1, kind: input, shape index: {}]
  %s2 = inlined_call_operand.vmem [shape: f32[1,128], index: 2, kind: input, shape index: {}]
  %s3 = inlined_call_operand.hbm [shape: bf16[128,128], index: 3, kind: input, shape index: {}]
  %s4 = inlined_call_operand.vmem [shape: f32[1,128], index: 4, kind: input, shape index: {}]
  %s5 = inlined_call_operand.vmem [shape: bf16[8,128], index: 5, kind: input, shape index: {}]
  %s6 = inlined_call_operand.<no memory space> [shape: f32[1,1], index: 6, kind: input, shape index: {}]
  %s7 = inlined_call_operand.hbm [shape: f32[1,16], index: 7, kind: output, shape index: {}]
  %s8 = sld [smem:[#allocation0]]
  $region50: #{tpu_custom_call.1} parent=0
    _
  %s10 = ssub.s32 1, %s8
  %s11 = scalar_select 0, %s10, %s8
  %v12 = vstv %s6
  %13 = vst [vmem:[#allocation2] sm:$0x1] %v12
  $region1: #{tpu_custom_call.1} parent=0
    #allocation3 [shape = 'u8[4096]{0}', space=vmem, size = 0x1000, scoped, tag = 'input window, operand 0, single buffered']
    #allocation4 [shape = 's32[1]{0}', space=sflag, size = 0x4, scoped, tag = 'scoped memory for tpu_custom_call.1']
    #allocation5 [shape = 's32[1]{0}', space=sflag, size = 0x4, scoped, tag = 'scoped memory for tpu_custom_call.1']
    #allocation6 [shape = 'u8[8192]{0}', space=vmem, size = 0x2000, scoped, tag = 'input window, operand 1, single buffered']
    #allocation7 [shape = 's32[1]{0}', space=sflag, size = 0x4, scoped, tag = 'scoped memory for tpu_custom_call.1']
    #allocation8 [shape = 'u8[32768]{0}', space=vmem, size = 0x8000, scoped, tag = 'input window, operand 3, single buffered']
    #allocation9 [shape = 'u8[512]{0}', space=vmem, size = 0x400, scoped, tag = 'output window, operand 0, single buffered']
    %14 = vsyncpa [#allocation4], 0
    %15 = vsyncpa [#allocation7], 0
    %16 = vsyncpa [#allocation5], 0
    // Predicated region
    $region2: #{tpu_custom_call.1} parent=1 // pred_check
      _
    $region3: #{tpu_custom_call.1} parent=1 // pred_check_branch
      %18 = sbr.rel (0) target = $region5
    $region4: #{tpu_custom_call.1} parent=1 // pred_region
      %s20 = ssub.s32 128, 128
      %21 = vsyncadd [#allocation4], %s20
      %s22 = sshll.u32 [#allocation3], 4
      %s23 = int_to_ptr.vmem [resolvable:$true] %s22
      %28 = dma.hbm_to_vmem [thread:$0]  %s0, 128, %s23, [#allocation4], 64, 64, 4
    $region5: #{tpu_custom_call.1} parent=1 // pred_fallthru
      _
    // Predicated region
    $region6: #{tpu_custom_call.1} parent=1 // pred_check
      _
    $region7: #{tpu_custom_call.1} parent=1 // pred_check_branch
      %30 = sbr.rel (0) target = $region9
    $region8: #{tpu_custom_call.1} parent=1 // pred_region
      %s32 = ssub.s32 256, 256
      %33 = vsyncadd [#allocation7], %s32
      %s34 = sshll.u32 [#allocation6], 4
      %s35 = int_to_ptr.vmem [resolvable:$true] %s34
      %40 = dma.hbm_to_vmem [thread:$0]  %s1, 256, %s35, [#allocation7], 64, 64, 4
    $region9: #{tpu_custom_call.1} parent=1 // pred_fallthru
      _
    // Predicated region
    $region10: #{tpu_custom_call.1} parent=1 // pred_check
      _
    $region11: #{tpu_custom_call.1} parent=1 // pred_check_branch
      %42 = sbr.rel (0) target = $region13
    $region12: #{tpu_custom_call.1} parent=1 // pred_region
      _
    $region13: #{tpu_custom_call.1} parent=1 // pred_fallthru
      _
    // Predicated region
    $region14: #{tpu_custom_call.1} parent=1 // pred_check
      _
    $region15: #{tpu_custom_call.1} parent=1 // pred_check_branch
      %44 = sbr.rel (0) target = $region17
    $region16: #{tpu_custom_call.1} parent=1 // pred_region
      %s46 = ssub.s32 1024, 1024
      %47 = vsyncadd [#allocation7], %s46
      %s48 = sshll.u32 [#allocation8], 4
      %s49 = int_to_ptr.vmem [resolvable:$true] %s48
      %54 = dma.hbm_to_vmem [thread:$0]  %s3, 1024, %s49, [#allocation7], 64, 64, 4
    $region17: #{tpu_custom_call.1} parent=1 // pred_fallthru
      _
    // Predicated region
    $region18: #{tpu_custom_call.1} parent=1 // pred_check
      _
    $region19: #{tpu_custom_call.1} parent=1 // pred_check_branch
      %56 = sbr.rel (0) target = $region21
    $region20: #{tpu_custom_call.1} parent=1 // pred_region
      _
    $region21: #{tpu_custom_call.1} parent=1 // pred_fallthru
      _
    // Predicated region
    $region22: #{tpu_custom_call.1} parent=1 // pred_check
      _
    $region23: #{tpu_custom_call.1} parent=1 // pred_check_branch
      %58 = sbr.rel (0) target = $region25
    $region24: #{tpu_custom_call.1} parent=1 // pred_region
      _
    $region25: #{tpu_custom_call.1} parent=1 // pred_fallthru
      _
    // Predicated region
    $region26: #{tpu_custom_call.1} parent=1 // pred_check
      _
    $region27: #{tpu_custom_call.1} parent=1 // pred_check_branch
      %60 = sbr.rel (0) target = $region29
    $region28: #{tpu_custom_call.1} parent=1 // pred_region
      _
    $region29: #{tpu_custom_call.1} parent=1 // pred_fallthru
      _
    // Predicated region
    $region30: #{tpu_custom_call.1} parent=1 // pred_check
      _
    $region31: #{tpu_custom_call.1} parent=1 // pred_check_branch
      %62 = sbr.rel (0) target = $region33
    $region32: #{tpu_custom_call.1} parent=1 // pred_region
      %63 = dma.done [#allocation4], 128
    $region33: #{tpu_custom_call.1} parent=1 // pred_fallthru
      _
    // Predicated region
    $region34: #{tpu_custom_call.1} parent=1 // pred_check
      _
    $region35: #{tpu_custom_call.1} parent=1 // pred_check_branch
      %65 = sbr.rel (0) target = $region37
    $region36: #{tpu_custom_call.1} parent=1 // pred_region
      %66 = dma.done [#allocation7], 256
    $region37: #{tpu_custom_call.1} parent=1 // pred_fallthru
      _
    // Predicated region
    $region38: #{tpu_custom_call.1} parent=1 // pred_check
      _
    $region39: #{tpu_custom_call.1} parent=1 // pred_check_branch
      %68 = sbr.rel (0) target = $region41
    $region40: #{tpu_custom_call.1} parent=1 // pred_region
      %69 = dma.done [#allocation7], 1024
    $region41: #{tpu_custom_call.1} parent=1 // pred_fallthru
      _
    %v71 = vld [vmem:[#allocation3] sm:$0xf]
    %v72 = vld [vmem:[#allocation3 + $0x4] sm:$0xf]
    %v73 = vld [vmem:[#allocation6] sm:$0xf]
    %v74 = vld [vmem:[#allocation6 + $0x4] sm:$0xf]
    %v75 = vld [vmem:[#allocation6 + $0x8] sm:$0xf]
    %v76 = vld [vmem:[#allocation6 + $0xc] sm:$0xf]
    %v77 = vld [vmem:[%s2] sm:$0x1]
    %v79 = vlaneseq
    %v80 = vshrl.u32 %v79, 7
    %v81 = vsub.s32 0, %v80
    %v82 = vrot.slane %v77, %v81
    %v86 = vunpack.c.l.b16 %v71
    %v87 = vunpack.c.l.b16 %v72
    %v88 = vpack.c.b16 %v87, %v86
    %v93 = vunpack.c.l.b16 %v73
    %v94 = vunpack.c.l.b16 %v74
    %v95 = vunpack.c.l.b16 %v75
    %v96 = vunpack.c.l.b16 %v76
    %v97 = vpack.c.b16 %v94, %v93
    %v98 = vpack.c.b16 %v96, %v95
    %vm101 = vcmask 261120
    %v103 = vsel %vm101, %v88, 0
    %105 = vmatprep.subr.bf16.mxu0 0
    %106 = vmatpush1.bf16.msra.mxu0 %v97
    %107 = vmatprep.subr.bf16.mxu0 0
    %108 = vmatpush1.bf16.msra.mxu0 %v98
    %109 = vmatprep.subr.bf16.mxu0 0
    %110 = vmatpush1.bf16.msra.mxu0 0
    %111 = vmatprep.subr.bf16.mxu0 0
    %112 = vmatpush1.bf16.msra.mxu0 0
    %113 = vmatprep.subr.bf16.mxu0 0
    %114 = vmatpush1.bf16.msra.mxu0 0
    %115 = vmatprep.subr.bf16.mxu0 0
    %116 = vmatpush1.bf16.msra.mxu0 0
    %117 = vmatprep.subr.bf16.mxu0 0
    %118 = vmatpush1.bf16.msra.mxu0 0
    %119 = vmatprep.subr.bf16.mxu0 0
    %120 = vmatpush1.bf16.msra.mxu0 0
    %121 = vmatprep.subr.bf16.mxu0 0
    %122 = vmatpush1.bf16.msra.mxu0 0
    %123 = vmatprep.subr.bf16.mxu0 0
    %124 = vmatpush1.bf16.msra.mxu0 0
    %125 = vmatprep.subr.bf16.mxu0 0
    %126 = vmatpush1.bf16.msra.mxu0 0
    %127 = vmatprep.subr.bf16.mxu0 0
    %128 = vmatpush1.bf16.msra.mxu0 0
    %129 = vmatprep.subr.bf16.mxu0 0
    %130 = vmatpush1.bf16.msra.mxu0 0
    %131 = vmatprep.subr.bf16.mxu0 0
    %132 = vmatpush1.bf16.msra.mxu0 0
    %133 = vmatprep.subr.bf16.mxu0 0
    %134 = vmatpush1.bf16.msra.mxu0 0
    %135 = vmatprep.subr.bf16.mxu0 0
    %136 = vmatpush1.bf16.msra.mxu0 0
    %137 = vmatprep.mubr.bf16.mxu0 0
    %138 = vmatmul.mubr.bf16.gmra.mrb[0].mxu0 %v103
    %v139 = vpop.f32.mrb[0].mxu0
    %v140 = vadd.f32 %v82, %v139
    %v141 = vpop.f32.mrb[0].mxu0
    %v142 = vpop.f32.mrb[0].mxu0
    %v143 = vadd.f32 %v82, %v142
    %v144 = vpop.f32.mrb[0].mxu0
    %145 = vdwg.mxu0
    %v146 = vmax.f32 %v140, 0.0
    %v147 = vmax.f32 %v143, 0.0
    %v148 = vpack.c.bf16 %v147, %v146
    %v149 = vld [vmem:[#allocation8] sm:$0xf]
    %v150 = vld [vmem:[#allocation8 + $0x4] sm:$0xf]
    %v151 = vld [vmem:[#allocation8 + $0x8] sm:$0xf]
    %v152 = vld [vmem:[#allocation8 + $0xc] sm:$0xf]
    %v153 = vld [vmem:[#allocation8 + $0x10] sm:$0xf]
    %v154 = vld [vmem:[#allocation8 + $0x14] sm:$0xf]
    %v155 = vld [vmem:[#allocation8 + $0x18] sm:$0xf]
    %v156 = vld [vmem:[#allocation8 + $0x1c] sm:$0xf]
    %v157 = vld [vmem:[#allocation8 + $0x20] sm:$0xf]
    %v158 = vld [vmem:[#allocation8 + $0x24] sm:$0xf]
    %v159 = vld [vmem:[#allocation8 + $0x28] sm:$0xf]
    %v160 = vld [vmem:[#allocation8 + $0x2c] sm:$0xf]
    %v161 = vld [vmem:[#allocation8 + $0x30] sm:$0xf]
    %v162 = vld [vmem:[#allocation8 + $0x34] sm:$0xf]
    %v163 = vld [vmem:[#allocation8 + $0x38] sm:$0xf]
    %v164 = vld [vmem:[#allocation8 + $0x3c] sm:$0xf]
    %v165 = vld [vmem:[%s4] sm:$0x1]
    %v167 = vlaneseq
    %v168 = vshrl.u32 %v167, 7
    %v169 = vsub.s32 0, %v168
    %v170 = vrot.slane %v165, %v169
    %v188 = vunpack.c.l.b16 %v149
    %v189 = vunpack.c.l.b16 %v150
    %v190 = vunpack.c.l.b16 %v151
    %v191 = vunpack.c.l.b16 %v152
    %v192 = vunpack.c.l.b16 %v153
    %v193 = vunpack.c.l.b16 %v154
    %v194 = vunpack.c.l.b16 %v155
    %v195 = vunpack.c.l.b16 %v156
    %v196 = vunpack.c.l.b16 %v157
    %v197 = vunpack.c.l.b16 %v158
    %v198 = vunpack.c.l.b16 %v159
    %v199 = vunpack.c.l.b16 %v160
    %v200 = vunpack.c.l.b16 %v161
    %v201 = vunpack.c.l.b16 %v162
    %v202 = vunpack.c.l.b16 %v163
    %v203 = vunpack.c.l.b16 %v164
    %v204 = vpack.c.b16 %v189, %v188
    %v205 = vpack.c.b16 %v191, %v190
    %v206 = vpack.c.b16 %v193, %v192
    %v207 = vpack.c.b16 %v195, %v194
    %v208 = vpack.c.b16 %v197, %v196
    %v209 = vpack.c.b16 %v199, %v198
    %v210 = vpack.c.b16 %v201, %v200
    %v211 = vpack.c.b16 %v203, %v202
    %220 = vmatprep.subr.bf16.mxu0 0
    %221 = vmatpush1.bf16.msra.mxu0 %v204
    %222 = vmatprep.subr.bf16.mxu0 0
    %223 = vmatpush1.bf16.msra.mxu0 %v205
    %224 = vmatprep.subr.bf16.mxu0 0
    %225 = vmatpush1.bf16.msra.mxu0 %v206
    %226 = vmatprep.subr.bf16.mxu0 0
    %227 = vmatpush1.bf16.msra.mxu0 %v207
    %228 = vmatprep.subr.bf16.mxu0 0
    %229 = vmatpush1.bf16.msra.mxu0 %v208
    %230 = vmatprep.subr.bf16.mxu0 0
    %231 = vmatpush1.bf16.msra.mxu0 %v209
    %232 = vmatprep.subr.bf16.mxu0 0
    %233 = vmatpush1.bf16.msra.mxu0 %v210
    %234 = vmatprep.subr.bf16.mxu0 0
    %235 = vmatpush1.bf16.msra.mxu0 %v211
    %236 = vmatprep.subr.bf16.mxu0 0
    %237 = vmatpush1.bf16.msra.mxu0 0
    %238 = vmatprep.subr.bf16.mxu0 0
    %239 = vmatpush1.bf16.msra.mxu0 0
    %240 = vmatprep.subr.bf16.mxu0 0
    %241 = vmatpush1.bf16.msra.mxu0 0
    %242 = vmatprep.subr.bf16.mxu0 0
    %243 = vmatpush1.bf16.msra.mxu0 0
    %244 = vmatprep.subr.bf16.mxu0 0
    %245 = vmatpush1.bf16.msra.mxu0 0
    %246 = vmatprep.subr.bf16.mxu0 0
    %247 = vmatpush1.bf16.msra.mxu0 0
    %248 = vmatprep.subr.bf16.mxu0 0
    %249 = vmatpush1.bf16.msra.mxu0 0
    %250 = vmatprep.subr.bf16.mxu0 0
    %251 = vmatpush1.bf16.msra.mxu0 0
    %252 = vmatprep.mubr.bf16.mxu0 0
    %253 = vmatmul.mubr.bf16.gmra.mrb[0].mxu0 %v148
    %v254 = vpop.f32.mrb[0].mxu0
    %v255 = vadd.f32 %v170, %v254
    %v256 = vpop.f32.mrb[0].mxu0
    %v257 = vpop.f32.mrb[0].mxu0
    %v258 = vadd.f32 %v170, %v257
    %v259 = vpop.f32.mrb[0].mxu0
    %260 = vdwg.mxu0
    %v261 = vmax.f32 %v255, 0.0
    %v262 = vmax.f32 %v258, 0.0
    %v263 = vpack.c.bf16 %v262, %v261
    %v264 = vld [vmem:[%s5] sm:$0xf]
    %265 = vmatprep.subr.bf16.mxu0 0
    %266 = vmatpush1.bf16.xpose.msra.mxu0 %v263
    %267 = vmatprep.subr.bf16.mxu0 0
    %268 = vmatpush1.bf16.xpose.msra.mxu0 0
    %269 = vmatprep.subr.bf16.mxu0 0
    %270 = vmatpush1.bf16.xpose.msra.mxu0 0
    %271 = vmatprep.subr.bf16.mxu0 0
    %272 = vmatpush1.bf16.xpose.msra.mxu0 0
    %273 = vmatprep.subr.bf16.mxu0 0
    %274 = vmatpush1.bf16.xpose.msra.mxu0 0
    %275 = vmatprep.subr.bf16.mxu0 0
    %276 = vmatpush1.bf16.xpose.msra.mxu0 0
    %277 = vmatprep.subr.bf16.mxu0 0
    %278 = vmatpush1.bf16.xpose.msra.mxu0 0
    %279 = vmatprep.subr.bf16.mxu0 0
    %280 = vmatpush1.bf16.xpose.msra.mxu0 0
    %281 = vmatprep.subr.bf16.mxu0 0
    %282 = vmatpush1.bf16.xpose.msra.mxu0 0
    %283 = vmatprep.subr.bf16.mxu0 0
    %284 = vmatpush1.bf16.xpose.msra.mxu0 0
    %285 = vmatprep.subr.bf16.mxu0 0
    %286 = vmatpush1.bf16.xpose.msra.mxu0 0
    %287 = vmatprep.subr.bf16.mxu0 0
    %288 = vmatpush1.bf16.xpose.msra.mxu0 0
    %289 = vmatprep.subr.bf16.mxu0 0
    %290 = vmatpush1.bf16.xpose.msra.mxu0 0
    %291 = vmatprep.subr.bf16.mxu0 0
    %292 = vmatpush1.bf16.xpose.msra.mxu0 0
    %293 = vmatprep.subr.bf16.mxu0 0
    %294 = vmatpush1.bf16.xpose.msra.mxu0 0
    %295 = vmatprep.subr.bf16.mxu0 0
    %296 = vmatpush1.bf16.xpose.msra.mxu0 0
    %297 = vmatprep.mubr.bf16.mxu0 0
    %298 = vmatmul.mubr.bf16.gmra.mrb[0].mxu0 %v264
    %v299 = vpop.f32.mrb[0].mxu0
    %v300 = vadd.f32 0.0, %v299
    %v301 = vpop.f32.mrb[0].mxu0
    %v302 = vpop.f32.mrb[0].mxu0
    %v303 = vpop.f32.mrb[0].mxu0
    %304 = vdwg.mxu0
    %v305 = vld [vmem:[#allocation2] sm:$0x1]
    %307 = vset.pattern.permute.xlu0 0
    %308 = vperm.xlu0 %307, %v305
    %v309 = vpop.permute.xlu0 %308
    %v311 = vlaneseq
    %v312 = vshrl.u32 %v311, 7
    %v313 = vsub.s32 0, %v312
    %v314 = vrot.slane %v309, %v313
    %v315 = vadd.f32 %v300, %v314
    %vm316 = vcmask 122880
    %317 = vst.msk [vmem:[#allocation9] sm:$0x1] %vm316, %v315
    // Predicated region
    $region42: #{tpu_custom_call.1} parent=1 // pred_check
      _
    $region43: #{tpu_custom_call.1} parent=1 // pred_check_branch
      %319 = sbr.rel (0) target = $region45
    $region44: #{tpu_custom_call.1} parent=1 // pred_region
      %s321 = ssub.s32 16, 16
      %322 = vsyncadd [#allocation5], %s321
      %s324 = sshll.u32 [#allocation9], 4
      %s325 = int_to_ptr.vmem [resolvable:$true] %s324
      %327 = dma.vmem_to_hbm [thread:$0]  %s325, 16, %s7, [#allocation5]
    $region45: #{tpu_custom_call.1} parent=1 // pred_fallthru
      _
    // Predicated region
    $region46: #{tpu_custom_call.1} parent=1 // pred_check
      _
    $region47: #{tpu_custom_call.1} parent=1 // pred_check_branch
      %329 = sbr.rel (0) target = $region49
    $region48: #{tpu_custom_call.1} parent=1 // pred_region
      %330 = dma.done [#allocation5], 16
    $region49: #{tpu_custom_call.1} parent=1 // pred_fallthru
      _
    %331 = vsyncpa [#allocation4], 1
    %332 = vsyncpa [#allocation7], 1
    %333 = vsyncpa [#allocation5], 1

</llo_original>
